<compile_context>
chip_gen: v5e
topology: v5e:2x2
jax: 0.10.0
libtpu: 0.0.40
codegen_flags: <defaults>
</compile_context>

<pallas_src>
import math

import jax
import jax.numpy as jnp
import numpy as np
from jax.experimental import pallas as pl
from jax.experimental.pallas import tpu as pltpu

# ---- model hyperparameters (small, consistent with the module) ----
D_IN = 32
D_OUT = 32
NUM_HEADS = 4
NUM_KV_GROUPS = 2
HEAD_DIM = D_OUT // NUM_HEADS            # 8
GROUP_SIZE = NUM_HEADS // NUM_KV_GROUPS  # 2
KV_DIM = NUM_KV_GROUPS * HEAD_DIM        # 16

BATCH = 2
SEQ = 8

QK_W = D_OUT + KV_DIM                    # 48 : roped q (32) + roped k (16)
PROJ_W = 2 * D_OUT + 3 * KV_DIM          # 112: [q | k | v | q_rot | k_rot]
LANES = 128                              # pad fused weight / aux / output to 128 lanes


# ----------------------------- Pallas kernel --------------------------------
def gqa_kernel(x_ref, w_big_ref, aux_ref, wo_ref, o_ref):
    bt = x_ref.shape[0]                  # B*T (static)

    x = x_ref[...]                       # (BT, d_in)
    aux = aux_ref[...]                   # (BT, 128): [cos_qk | sin_qk | mask | pad]
    wo = wo_ref[...]                     # (d_out, 128) zero-padded out-proj weight

    # One fused MXU push: [q | k | v | q@R | k@R | pad]  (scale already folded in).
    proj = jnp.dot(x, w_big_ref[...], preferred_element_type=jnp.float32)  # (BT,128)

    cos_qk = aux[:, :QK_W]
    sin_qk = aux[:, QK_W:2 * QK_W]
    mask = aux[:, 2 * QK_W:2 * QK_W + bt]            # (BT, BT) additive block-causal

    # RoPE for q and k in one shot on a 48-wide lane-dense slab.
    lin = proj[:, :QK_W]                              # [q | k]
    rot = proj[:, D_OUT + 2 * KV_DIM:D_OUT + 2 * KV_DIM + QK_W]  # [q@Rq | k@Rk]
    qk = lin * cos_qk + rot * sin_qk

    q = qk[:, :D_OUT]                                 # (BT, 32), pre-scaled by 1/sqrt(hd)
    k = qk[:, D_OUT:]                                 # (BT, 16)
    v = proj[:, QK_W:QK_W + KV_DIM]                   # (BT, 16)

    # Grouped causal attention; accumulate directly into the (lane-dense,
    # 128-wide) output projection instead of concatenating head outputs.
    y = jnp.zeros((bt, o_ref.shape[1]), jnp.float32)
    for g in range(NUM_KV_GROUPS):
        kg = k[:, g * HEAD_DIM:(g + 1) * HEAD_DIM]    # (BT, 8), shared by GROUP_SIZE heads
        vg = v[:, g * HEAD_DIM:(g + 1) * HEAD_DIM]    # (BT, 8)
        for j in range(GROUP_SIZE):
            h = g * GROUP_SIZE + j
            qh = q[:, h * HEAD_DIM:(h + 1) * HEAD_DIM]
            s = jax.lax.dot_general(
                qh, kg, (((1,), (1,)), ((), ())),
                preferred_element_type=jnp.float32) + mask      # (BT, BT)
            m = jnp.max(s, axis=-1, keepdims=True)
            p = jnp.exp(s - m)
            p = p * pl.reciprocal(jnp.sum(p, axis=-1, keepdims=True), approx=True)
            attn_h = jnp.dot(p, vg, preferred_element_type=jnp.float32)   # (BT, 8)
            y = y + jnp.dot(attn_h, wo[h * HEAD_DIM:(h + 1) * HEAD_DIM, :],
                            preferred_element_type=jnp.float32)
    o_ref[...] = y.astype(o_ref.dtype)


# ------------------------------ wrapper --------------------------------------
def _rope_rotation_matrix(head_dim):
    """R such that x @ R == concat([-x2, x1]) (the torch rotate_half)."""
    half = head_dim // 2
    r = np.zeros((head_dim, head_dim), np.float32)
    for i in range(half):
        r[i + half, i] = -1.0     # rotated[:half] = -x2
        r[i, i + half] = 1.0      # rotated[half:] =  x1
    return jnp.asarray(r)


@jax.jit
def gqa_forward(x, cos, sin, wq, wk, wv, wo):
    b, t, d_in = x.shape
    bt = b * t
    assert 2 * QK_W + bt <= LANES, "aux table packing assumes small B*T"

    # --- fold scale + RoPE rotation into a single fused projection weight ---
    scale = 1.0 / math.sqrt(HEAD_DIM)
    wq_s = wq * scale
    r_head = _rope_rotation_matrix(HEAD_DIM)
    r_q = jnp.kron(jnp.eye(NUM_HEADS, dtype=jnp.float32), r_head)        # (32, 32)
    r_k = jnp.kron(jnp.eye(NUM_KV_GROUPS, dtype=jnp.float32), r_head)    # (16, 16)
    w_big = jnp.concatenate(
        [wq_s, wk, wv, wq_s @ r_q, wk @ r_k,
         jnp.zeros((d_in, LANES - PROJ_W), jnp.float32)], axis=1)        # (d_in, 128)

    # --- pack cos/sin (tiled per head / per kv-group) + mask into one table ---
    cos_qk = jnp.concatenate([jnp.tile(cos, (1, NUM_HEADS)),
                              jnp.tile(cos, (1, NUM_KV_GROUPS))], axis=1)  # (T, 48)
    sin_qk = jnp.concatenate([jnp.tile(sin, (1, NUM_HEADS)),
                              jnp.tile(sin, (1, NUM_KV_GROUPS))], axis=1)  # (T, 48)
    cos_bt = jnp.tile(cos_qk, (b, 1))                                      # (BT, 48)
    sin_bt = jnp.tile(sin_qk, (b, 1))

    idx = jnp.arange(bt)
    same_batch = (idx[:, None] // t) == (idx[None, :] // t)
    causal = (idx[:, None] % t) >= (idx[None, :] % t)
    mask = jnp.where(same_batch & causal, 0.0, -1e30).astype(jnp.float32)  # (BT, BT)

    aux = jnp.concatenate(
        [cos_bt, sin_bt, mask,
         jnp.zeros((bt, LANES - 2 * QK_W - bt), jnp.float32)], axis=1)     # (BT, 128)

    # --- lane-dense (zero-padded) output projection weight ---
    wo_pad = jnp.concatenate(
        [wo, jnp.zeros((D_OUT, LANES - D_OUT), jnp.float32)], axis=1)      # (d_out, 128)

    x2d = x.reshape(bt, d_in)

    vmem = pl.BlockSpec(memory_space=pltpu.MemorySpace.VMEM)
    out_pad = pl.pallas_call(
        gqa_kernel,
        out_shape=jax.ShapeDtypeStruct((bt, LANES), jnp.float32),
        in_specs=[vmem, vmem, vmem, vmem],
        out_specs=vmem,
    )(x2d, w_big, aux, wo_pad)

    return out_pad[:, :D_OUT].reshape(b, t, D_OUT)


# ---------------- pure-JAX reference (mirrors the torch forward) -------------
def _rope_ref(x, cos, sin):
    hd = x.shape[-1]
    x1 = x[..., : hd // 2]
    x2 = x[..., hd // 2:]
    c = cos[None, None, : x.shape[2], :]
    s = sin[None, None, : x.shape[2], :]
    rotated = jnp.concatenate([-x2, x1], axis=-1)
    return x * c + rotated * s


def ref_forward(x, cos, sin, wq, wk, wv, wo):
    b, t, _ = x.shape
    q = (x @ wq).reshape(b, t, NUM_HEADS, HEAD_DIM).transpose(0, 2, 1, 3)
    k = (x @ wk).reshape(b, t, NUM_KV_GROUPS, HEAD_DIM).transpose(0, 2, 1, 3)
    v = (x @ wv).reshape(b, t, NUM_KV_GROUPS, HEAD_DIM).transpose(0, 2, 1, 3)
    q = _rope_ref(q, cos, sin)
    k = _rope_ref(k, cos, sin)
    k = jnp.repeat(k, GROUP_SIZE, axis=1)
    v = jnp.repeat(v, GROUP_SIZE, axis=1)
    s = jnp.einsum("bhqd,bhkd->bhqk", q, k) / math.sqrt(HEAD_DIM)
    causal = jnp.tril(jnp.ones((t, t), dtype=bool))
    s = jnp.where(causal[None, None], s, -1e30)
    p = jax.nn.softmax(s, axis=-1)
    o = jnp.einsum("bhqk,bhkd->bhqd", p, v)
    o = o.transpose(0, 2, 1, 3).reshape(b, t, D_OUT)
    return o @ wo


def compute_rope_params(head_dim, context_len, theta=10000.0):
    inv_freq = 1.0 / (theta ** (jnp.arange(0, head_dim, 2, dtype=jnp.float32) / head_dim))
    pos = jnp.arange(context_len, dtype=jnp.float32)
    angles = pos[:, None] * inv_freq[None, :]            # (T, hd/2)
    angles = jnp.concatenate([angles, angles], axis=-1)  # (T, hd)
    return jnp.cos(angles), jnp.sin(angles)


if __name__ == "__main__":
    key = jax.random.PRNGKey(0)
    kx, kq, kk, kv, ko = jax.random.split(key, 5)

    x = jax.random.normal(kx, (BATCH, SEQ, D_IN), dtype=jnp.float32)
    # Parameters stored as (in, out), i.e. W_linear.T.
    wq = jax.random.normal(kq, (D_IN, D_OUT), dtype=jnp.float32) * 0.05
    wk = jax.random.normal(kk, (D_IN, KV_DIM), dtype=jnp.float32) * 0.05
    wv = jax.random.normal(kv, (D_IN, KV_DIM), dtype=jnp.float32) * 0.05
    wo = jax.random.normal(ko, (D_OUT, D_OUT), dtype=jnp.float32) * 0.05

    cos, sin = compute_rope_params(HEAD_DIM, SEQ)

    out = gqa_forward(x, cos, sin, wq, wk, wv, wo)
    out = jax.block_until_ready(out)

    ref = ref_forward(x, cos, sin, wq, wk, wv, wo)
    np.testing.assert_allclose(np.asarray(out), np.asarray(ref),
                               rtol=2e-3, atol=2e-3)
    print("KERNEL_OK")
</pallas_src>

<mosaic_0001>
module attributes {stable_mosaic.version = 11 : i64} {
  func.func @gqa_kernel(%arg0: memref<16x32xf32, #tpu.memory_space<vmem>>, %arg1: memref<32x128xf32, #tpu.memory_space<vmem>>, %arg2: memref<16x128xf32, #tpu.memory_space<vmem>>, %arg3: memref<32x128xf32, #tpu.memory_space<vmem>>, %arg4: memref<16x128xf32, #tpu.memory_space<vmem>>) attributes {dimension_semantics = [], scalar_prefetch = 0 : i64, scratch_operands = 0 : i64, tpu.core_type = #tpu.core_type<tc>} {
    %c0 = arith.constant 0 : index
    %c0_0 = arith.constant 0 : index
    %0 = vector.load %arg0[%c0, %c0_0] : memref<16x32xf32, #tpu.memory_space<vmem>>, vector<16x32xf32>
    %c0_1 = arith.constant 0 : index
    %c0_2 = arith.constant 0 : index
    %1 = vector.load %arg2[%c0_1, %c0_2] : memref<16x128xf32, #tpu.memory_space<vmem>>, vector<16x128xf32>
    %c0_3 = arith.constant 0 : index
    %c0_4 = arith.constant 0 : index
    %2 = vector.load %arg3[%c0_3, %c0_4] : memref<32x128xf32, #tpu.memory_space<vmem>>, vector<32x128xf32>
    %c0_5 = arith.constant 0 : index
    %c0_6 = arith.constant 0 : index
    %3 = vector.load %arg1[%c0_5, %c0_6] : memref<32x128xf32, #tpu.memory_space<vmem>>, vector<32x128xf32>
    %cst = arith.constant dense<0.000000e+00> : vector<16x128xf32>
    %4 = tpu.matmul %0, %3, %cst {dimension_numbers = #tpu.dot_dimension_numbers<[1], [0], [0], [1], [0, 0, 1, 1], [], []>} : vector<16x32xf32>, vector<32x128xf32>, vector<16x128xf32> -> vector<16x128xf32>
    %5 = vector.extract_strided_slice %1 {offsets = [0, 0], sizes = [16, 48], strides = [1, 1]} : vector<16x128xf32> to vector<16x48xf32>
    %6 = vector.extract_strided_slice %1 {offsets = [0, 48], sizes = [16, 48], strides = [1, 1]} : vector<16x128xf32> to vector<16x48xf32>
    %7 = vector.extract_strided_slice %1 {offsets = [0, 96], sizes = [16, 16], strides = [1, 1]} : vector<16x128xf32> to vector<16x16xf32>
    %8 = vector.extract_strided_slice %4 {offsets = [0, 0], sizes = [16, 48], strides = [1, 1]} : vector<16x128xf32> to vector<16x48xf32>
    %9 = vector.extract_strided_slice %4 {offsets = [0, 64], sizes = [16, 48], strides = [1, 1]} : vector<16x128xf32> to vector<16x48xf32>
    %10 = arith.mulf %8, %5 : vector<16x48xf32>
    %11 = arith.mulf %9, %6 : vector<16x48xf32>
    %12 = arith.addf %10, %11 : vector<16x48xf32>
    %13 = vector.extract_strided_slice %12 {offsets = [0, 0], sizes = [16, 32], strides = [1, 1]} : vector<16x48xf32> to vector<16x32xf32>
    %14 = vector.extract_strided_slice %12 {offsets = [0, 32], sizes = [16, 16], strides = [1, 1]} : vector<16x48xf32> to vector<16x16xf32>
    %15 = vector.extract_strided_slice %4 {offsets = [0, 48], sizes = [16, 16], strides = [1, 1]} : vector<16x128xf32> to vector<16x16xf32>
    %cst_7 = arith.constant 0.000000e+00 : f32
    %16 = vector.broadcast %cst_7 : f32 to vector<16x128xf32>
    %17 = vector.extract_strided_slice %14 {offsets = [0, 0], sizes = [16, 8], strides = [1, 1]} : vector<16x16xf32> to vector<16x8xf32>
    %18 = vector.extract_strided_slice %15 {offsets = [0, 0], sizes = [16, 8], strides = [1, 1]} : vector<16x16xf32> to vector<16x8xf32>
    %19 = vector.extract_strided_slice %13 {offsets = [0, 0], sizes = [16, 8], strides = [1, 1]} : vector<16x32xf32> to vector<16x8xf32>
    %cst_8 = arith.constant dense<0.000000e+00> : vector<16x16xf32>
    %20 = tpu.matmul %19, %17, %cst_8 {dimension_numbers = #tpu.dot_dimension_numbers<[1], [1], [0], [0], [0, 0, 1, 0], [], []>} : vector<16x8xf32>, vector<16x8xf32>, vector<16x16xf32> -> vector<16x16xf32>
    %21 = arith.addf %20, %7 : vector<16x16xf32>
    %cst_9 = arith.constant dense<0xFF800000> : vector<16xf32>
    %22 = vector.multi_reduction <maximumf>, %21, %cst_9 [1] : vector<16x16xf32> to vector<16xf32>
    %23 = vector.shape_cast %22 : vector<16xf32> to vector<16x1xf32>
    %24 = vector.broadcast %23 : vector<16x1xf32> to vector<16x16xf32>
    %25 = arith.subf %21, %24 : vector<16x16xf32>
    %26 = math.exp %25 : vector<16x16xf32>
    %cst_10 = arith.constant dense<0.000000e+00> : vector<16xf32>
    %27 = vector.multi_reduction <add>, %26, %cst_10 [1] : vector<16x16xf32> to vector<16xf32>
    %28 = vector.shape_cast %27 : vector<16xf32> to vector<16x1xf32>
    %29 = tpu.reciprocal %28 {approx = true} : vector<16x1xf32> -> vector<16x1xf32>
    %30 = vector.broadcast %29 : vector<16x1xf32> to vector<16x16xf32>
    %31 = arith.mulf %26, %30 : vector<16x16xf32>
    %cst_11 = arith.constant dense<0.000000e+00> : vector<16x8xf32>
    %32 = tpu.matmul %31, %18, %cst_11 {dimension_numbers = #tpu.dot_dimension_numbers<[1], [0], [0], [1], [0, 0, 1, 1], [], []>} : vector<16x16xf32>, vector<16x8xf32>, vector<16x8xf32> -> vector<16x8xf32>
    %33 = vector.extract_strided_slice %2 {offsets = [0, 0], sizes = [8, 128], strides = [1, 1]} : vector<32x128xf32> to vector<8x128xf32>
    %cst_12 = arith.constant dense<0.000000e+00> : vector<16x128xf32>
    %34 = tpu.matmul %32, %33, %cst_12 {dimension_numbers = #tpu.dot_dimension_numbers<[1], [0], [0], [1], [0, 0, 1, 1], [], []>} : vector<16x8xf32>, vector<8x128xf32>, vector<16x128xf32> -> vector<16x128xf32>
    %35 = arith.addf %16, %34 : vector<16x128xf32>
    %36 = vector.extract_strided_slice %13 {offsets = [0, 8], sizes = [16, 8], strides = [1, 1]} : vector<16x32xf32> to vector<16x8xf32>
    %cst_13 = arith.constant dense<0.000000e+00> : vector<16x16xf32>
    %37 = tpu.matmul %36, %17, %cst_13 {dimension_numbers = #tpu.dot_dimension_numbers<[1], [1], [0], [0], [0, 0, 1, 0], [], []>} : vector<16x8xf32>, vector<16x8xf32>, vector<16x16xf32> -> vector<16x16xf32>
    %38 = arith.addf %37, %7 : vector<16x16xf32>
    %cst_14 = arith.constant dense<0xFF800000> : vector<16xf32>
    %39 = vector.multi_reduction <maximumf>, %38, %cst_14 [1] : vector<16x16xf32> to vector<16xf32>
    %40 = vector.shape_cast %39 : vector<16xf32> to vector<16x1xf32>
    %41 = vector.broadcast %40 : vector<16x1xf32> to vector<16x16xf32>
    %42 = arith.subf %38, %41 : vector<16x16xf32>
    %43 = math.exp %42 : vector<16x16xf32>
    %cst_15 = arith.constant dense<0.000000e+00> : vector<16xf32>
    %44 = vector.multi_reduction <add>, %43, %cst_15 [1] : vector<16x16xf32> to vector<16xf32>
    %45 = vector.shape_cast %44 : vector<16xf32> to vector<16x1xf32>
    %46 = tpu.reciprocal %45 {approx = true} : vector<16x1xf32> -> vector<16x1xf32>
    %47 = vector.broadcast %46 : vector<16x1xf32> to vector<16x16xf32>
    %48 = arith.mulf %43, %47 : vector<16x16xf32>
    %cst_16 = arith.constant dense<0.000000e+00> : vector<16x8xf32>
    %49 = tpu.matmul %48, %18, %cst_16 {dimension_numbers = #tpu.dot_dimension_numbers<[1], [0], [0], [1], [0, 0, 1, 1], [], []>} : vector<16x16xf32>, vector<16x8xf32>, vector<16x8xf32> -> vector<16x8xf32>
    %50 = vector.extract_strided_slice %2 {offsets = [8, 0], sizes = [8, 128], strides = [1, 1]} : vector<32x128xf32> to vector<8x128xf32>
    %cst_17 = arith.constant dense<0.000000e+00> : vector<16x128xf32>
    %51 = tpu.matmul %49, %50, %cst_17 {dimension_numbers = #tpu.dot_dimension_numbers<[1], [0], [0], [1], [0, 0, 1, 1], [], []>} : vector<16x8xf32>, vector<8x128xf32>, vector<16x128xf32> -> vector<16x128xf32>
    %52 = arith.addf %35, %51 : vector<16x128xf32>
    %53 = vector.extract_strided_slice %14 {offsets = [0, 8], sizes = [16, 8], strides = [1, 1]} : vector<16x16xf32> to vector<16x8xf32>
    %54 = vector.extract_strided_slice %15 {offsets = [0, 8], sizes = [16, 8], strides = [1, 1]} : vector<16x16xf32> to vector<16x8xf32>
    %55 = vector.extract_strided_slice %13 {offsets = [0, 16], sizes = [16, 8], strides = [1, 1]} : vector<16x32xf32> to vector<16x8xf32>
    %cst_18 = arith.constant dense<0.000000e+00> : vector<16x16xf32>
    %56 = tpu.matmul %55, %53, %cst_18 {dimension_numbers = #tpu.dot_dimension_numbers<[1], [1], [0], [0], [0, 0, 1, 0], [], []>} : vector<16x8xf32>, vector<16x8xf32>, vector<16x16xf32> -> vector<16x16xf32>
    %57 = arith.addf %56, %7 : vector<16x16xf32>
    %cst_19 = arith.constant dense<0xFF800000> : vector<16xf32>
    %58 = vector.multi_reduction <maximumf>, %57, %cst_19 [1] : vector<16x16xf32> to vector<16xf32>
    %59 = vector.shape_cast %58 : vector<16xf32> to vector<16x1xf32>
    %60 = vector.broadcast %59 : vector<16x1xf32> to vector<16x16xf32>
    %61 = arith.subf %57, %60 : vector<16x16xf32>
    %62 = math.exp %61 : vector<16x16xf32>
    %cst_20 = arith.constant dense<0.000000e+00> : vector<16xf32>
    %63 = vector.multi_reduction <add>, %62, %cst_20 [1] : vector<16x16xf32> to vector<16xf32>
    %64 = vector.shape_cast %63 : vector<16xf32> to vector<16x1xf32>
    %65 = tpu.reciprocal %64 {approx = true} : vector<16x1xf32> -> vector<16x1xf32>
    %66 = vector.broadcast %65 : vector<16x1xf32> to vector<16x16xf32>
    %67 = arith.mulf %62, %66 : vector<16x16xf32>
    %cst_21 = arith.constant dense<0.000000e+00> : vector<16x8xf32>
    %68 = tpu.matmul %67, %54, %cst_21 {dimension_numbers = #tpu.dot_dimension_numbers<[1], [0], [0], [1], [0, 0, 1, 1], [], []>} : vector<16x16xf32>, vector<16x8xf32>, vector<16x8xf32> -> vector<16x8xf32>
    %69 = vector.extract_strided_slice %2 {offsets = [16, 0], sizes = [8, 128], strides = [1, 1]} : vector<32x128xf32> to vector<8x128xf32>
    %cst_22 = arith.constant dense<0.000000e+00> : vector<16x128xf32>
    %70 = tpu.matmul %68, %69, %cst_22 {dimension_numbers = #tpu.dot_dimension_numbers<[1], [0], [0], [1], [0, 0, 1, 1], [], []>} : vector<16x8xf32>, vector<8x128xf32>, vector<16x128xf32> -> vector<16x128xf32>
    %71 = arith.addf %52, %70 : vector<16x128xf32>
    %72 = vector.extract_strided_slice %13 {offsets = [0, 24], sizes = [16, 8], strides = [1, 1]} : vector<16x32xf32> to vector<16x8xf32>
    %cst_23 = arith.constant dense<0.000000e+00> : vector<16x16xf32>
    %73 = tpu.matmul %72, %53, %cst_23 {dimension_numbers = #tpu.dot_dimension_numbers<[1], [1], [0], [0], [0, 0, 1, 0], [], []>} : vector<16x8xf32>, vector<16x8xf32>, vector<16x16xf32> -> vector<16x16xf32>
    %74 = arith.addf %73, %7 : vector<16x16xf32>
    %cst_24 = arith.constant dense<0xFF800000> : vector<16xf32>
    %75 = vector.multi_reduction <maximumf>, %74, %cst_24 [1] : vector<16x16xf32> to vector<16xf32>
    %76 = vector.shape_cast %75 : vector<16xf32> to vector<16x1xf32>
    %77 = vector.broadcast %76 : vector<16x1xf32> to vector<16x16xf32>
    %78 = arith.subf %74, %77 : vector<16x16xf32>
    %79 = math.exp %78 : vector<16x16xf32>
    %cst_25 = arith.constant dense<0.000000e+00> : vector<16xf32>
    %80 = vector.multi_reduction <add>, %79, %cst_25 [1] : vector<16x16xf32> to vector<16xf32>
    %81 = vector.shape_cast %80 : vector<16xf32> to vector<16x1xf32>
    %82 = tpu.reciprocal %81 {approx = true} : vector<16x1xf32> -> vector<16x1xf32>
    %83 = vector.broadcast %82 : vector<16x1xf32> to vector<16x16xf32>
    %84 = arith.mulf %79, %83 : vector<16x16xf32>
    %cst_26 = arith.constant dense<0.000000e+00> : vector<16x8xf32>
    %85 = tpu.matmul %84, %54, %cst_26 {dimension_numbers = #tpu.dot_dimension_numbers<[1], [0], [0], [1], [0, 0, 1, 1], [], []>} : vector<16x16xf32>, vector<16x8xf32>, vector<16x8xf32> -> vector<16x8xf32>
    %86 = vector.extract_strided_slice %2 {offsets = [24, 0], sizes = [8, 128], strides = [1, 1]} : vector<32x128xf32> to vector<8x128xf32>
    %cst_27 = arith.constant dense<0.000000e+00> : vector<16x128xf32>
    %87 = tpu.matmul %85, %86, %cst_27 {dimension_numbers = #tpu.dot_dimension_numbers<[1], [0], [0], [1], [0, 0, 1, 1], [], []>} : vector<16x8xf32>, vector<8x128xf32>, vector<16x128xf32> -> vector<16x128xf32>
    %88 = arith.addf %71, %87 : vector<16x128xf32>
    %c0_28 = arith.constant 0 : index
    %c0_29 = arith.constant 0 : index
    %89 = vector.load %arg4[%c0_28, %c0_29] : memref<16x128xf32, #tpu.memory_space<vmem>>, vector<16x128xf32>
    tpu.vector_store %arg4[%c0_28, %c0_29], %88 {strides = array<i32>} : memref<16x128xf32, #tpu.memory_space<vmem>>, vector<16x128xf32>,
    return
  }
}

</mosaic_0001>

<llo_original>
// kernel: tile.44
$region0: #{tile.44}
  %s0 = inlined_call_operand.vmem [shape: f32[8,4,8], index: 0, kind: input, shape index: {}]
  %s1 = inlined_call_operand.vmem [shape: f32[8,32], index: 1, kind: output, shape index: {}]
  $region1: #{tile.44} parent=0
    #allocation0 [shape = 'u8[32768]{0}', space=vmem, size = 0x8000, scoped, tag = 'scoped mem for input reshape']
    %s3 = ssub.s32 16, 1
    %s4 = scalar_lea.vmem %s0, 28
    %v5 = vld [vmem:[%s4] sm:%s3]
    %s6 = scalar_lea.vmem [#allocation0], 56
    %7 = vst [vmem:[%s6] sm:%s3] %v5
    %s8 = scalar_lea.vmem %s0, 24
    %v9 = vld [vmem:[%s8] sm:%s3]
    %s10 = scalar_lea.vmem [#allocation0], 48
    %11 = vst [vmem:[%s10] sm:%s3] %v9
    %s12 = scalar_lea.vmem %s0, 20
    %v13 = vld [vmem:[%s12] sm:%s3]
    %s14 = scalar_lea.vmem [#allocation0], 40
    %15 = vst [vmem:[%s14] sm:%s3] %v13
    %s16 = scalar_lea.vmem %s0, 16
    %v17 = vld [vmem:[%s16] sm:%s3]
    %s18 = scalar_lea.vmem [#allocation0], 32
    %19 = vst [vmem:[%s18] sm:%s3] %v17
    %s20 = scalar_lea.vmem %s0, 12
    %v21 = vld [vmem:[%s20] sm:%s3]
    %s22 = scalar_lea.vmem [#allocation0], 24
    %23 = vst [vmem:[%s22] sm:%s3] %v21
    %s24 = scalar_lea.vmem %s0, 8
    %v25 = vld [vmem:[%s24] sm:%s3]
    %s26 = scalar_lea.vmem [#allocation0], 16
    %27 = vst [vmem:[%s26] sm:%s3] %v25
    %s28 = scalar_lea.vmem %s0, 4
    %v29 = vld [vmem:[%s28] sm:%s3]
    %s30 = scalar_lea.vmem [#allocation0], 8
    %31 = vst [vmem:[%s30] sm:%s3] %v29
    %v32 = vld [vmem:[%s0] sm:%s3]
    %33 = vst [vmem:[#allocation0] sm:%s3] %v32
    %v34 = vld [vmem:[#allocation0] ss:$8 sm:$0xf]
    %v35 = vld [vmem:[#allocation0] ss:$8 sm:$0xf0]
    %vm36 = vcmask 1047556
    %v37 = vsel %vm36, %v35, %v34
    %vm38 = vcmask 64512
    %39 = vst.msk [vmem:[%s1] sm:$0xff] %vm38, %v37
    %s40 = scalar_lea.vmem [#allocation0], 3
    %v41 = vld [vmem:[%s40] ss:$8 sm:$0xf]
    %s42 = scalar_lea.vmem [#allocation0], 3
    %v43 = vld [vmem:[%s42] ss:$8 sm:$0xf0]
    %vm44 = vcmask 1047556
    %v45 = vsel %vm44, %v43, %v41
    %46 = vrot.lane.b32.xlu0 %v45, 24
    %v47 = vpop.permute.xlu0 %46
    %vm48 = vcmask 261312
    %49 = vst.msk [vmem:[%s1] sm:$0xff] %vm48, %v47
    %s50 = scalar_lea.vmem [#allocation0], 2
    %v51 = vld [vmem:[%s50] ss:$8 sm:$0xf]
    %s52 = scalar_lea.vmem [#allocation0], 2
    %v53 = vld [vmem:[%s52] ss:$8 sm:$0xf0]
    %vm54 = vcmask 1047556
    %v55 = vsel %vm54, %v53, %v51
    %56 = vrot.lane.b32.xlu0 %v55, 16
    %v57 = vpop.permute.xlu0 %56
    %vm58 = vcmask 195712
    %59 = vst.msk [vmem:[%s1] sm:$0xff] %vm58, %v57
    %s60 = scalar_lea.vmem [#allocation0], 1
    %v61 = vld [vmem:[%s60] ss:$8 sm:$0xf]
    %s62 = scalar_lea.vmem [#allocation0], 1
    %v63 = vld [vmem:[%s62] ss:$8 sm:$0xf0]
    %vm64 = vcmask 1047556
    %v65 = vsel %vm64, %v63, %v61
    %66 = vrot.lane.b32.xlu0 %v65, 8
    %v67 = vpop.permute.xlu0 %66
    %vm68 = vcmask 130112
    %69 = vst.msk [vmem:[%s1] sm:$0xff] %vm68, %v67

// kernel: tile.49
$region0: #{tile.49}
  %s0 = inlined_call_operand.vmem [shape: f32[8,2,8], index: 0, kind: input, shape index: {}]
  %s1 = inlined_call_operand.vmem [shape: f32[8,16], index: 1, kind: output, shape index: {}]
  $region1: #{tile.49} parent=0
    #allocation0 [shape = 'u8[32768]{0}', space=vmem, size = 0x8000, scoped, tag = 'scoped mem for input reshape']
    %s3 = ssub.s32 4, 1
    %s4 = scalar_lea.vmem %s0, 14
    %v5 = vld [vmem:[%s4] sm:%s3]
    %s6 = scalar_lea.vmem [#allocation0], 56
    %7 = vst [vmem:[%s6] sm:%s3] %v5
    %s8 = scalar_lea.vmem %s0, 12
    %v9 = vld [vmem:[%s8] sm:%s3]
    %s10 = scalar_lea.vmem [#allocation0], 48
    %11 = vst [vmem:[%s10] sm:%s3] %v9
    %s12 = scalar_lea.vmem %s0, 10
    %v13 = vld [vmem:[%s12] sm:%s3]
    %s14 = scalar_lea.vmem [#allocation0], 40
    %15 = vst [vmem:[%s14] sm:%s3] %v13
    %s16 = scalar_lea.vmem %s0, 8
    %v17 = vld [vmem:[%s16] sm:%s3]
    %s18 = scalar_lea.vmem [#allocation0], 32
    %19 = vst [vmem:[%s18] sm:%s3] %v17
    %s20 = scalar_lea.vmem %s0, 6
    %v21 = vld [vmem:[%s20] sm:%s3]
    %s22 = scalar_lea.vmem [#allocation0], 24
    %23 = vst [vmem:[%s22] sm:%s3] %v21
    %s24 = scalar_lea.vmem %s0, 4
    %v25 = vld [vmem:[%s24] sm:%s3]
    %s26 = scalar_lea.vmem [#allocation0], 16
    %27 = vst [vmem:[%s26] sm:%s3] %v25
    %s28 = scalar_lea.vmem %s0, 2
    %v29 = vld [vmem:[%s28] sm:%s3]
    %s30 = scalar_lea.vmem [#allocation0], 8
    %31 = vst [vmem:[%s30] sm:%s3] %v29
    %v32 = vld [vmem:[%s0] sm:%s3]
    %33 = vst [vmem:[#allocation0] sm:%s3] %v32
    %v34 = vld [vmem:[#allocation0] ss:$8 sm:$0xf]
    %v35 = vld [vmem:[#allocation0] ss:$8 sm:$0xf0]
    %vm36 = vcmask 1047556
    %v37 = vsel %vm36, %v35, %v34
    %vm38 = vcmask 64512
    %39 = vst.msk [vmem:[%s1] sm:$0xff] %vm38, %v37
    %s40 = scalar_lea.vmem [#allocation0], 1
    %v41 = vld [vmem:[%s40] ss:$8 sm:$0xf]
    %s42 = scalar_lea.vmem [#allocation0], 1
    %v43 = vld [vmem:[%s42] ss:$8 sm:$0xf0]
    %vm44 = vcmask 1047556
    %v45 = vsel %vm44, %v43, %v41
    %46 = vrot.lane.b32.xlu0 %v45, 8
    %v47 = vpop.permute.xlu0 %46
    %vm48 = vcmask 130112
    %49 = vst.msk [vmem:[%s1] sm:$0xff] %vm48, %v47

// kernel: gqa_forward.1
$region0: #{gqa_forward.1}
  #allocation0 [shape = 'u32[]', space=smem, size = 0x4, offset = 0x4, fixed_abs, tag = 'smem constant byte address 0x4 - core index']
  #allocation1 [shape = 'u32[72,128]{1,0:T(1,128)}', space=vmem, size = 0x9000, scoped, tag = 'internal scratch']
  %s0 = inlined_call_operand.vmem [shape: f32[16,32], index: 0, kind: input, shape index: {}]
  %s1 = inlined_call_operand.vmem [shape: f32[32,128], index: 1, kind: input, shape index: {}]
  %s2 = inlined_call_operand.vmem [shape: f32[16,128], index: 2, kind: input, shape index: {}]
  %s3 = inlined_call_operand.vmem [shape: f32[32,128], index: 3, kind: input, shape index: {}]
  %s4 = inlined_call_operand.vmem [shape: f32[16,128], index: 4, kind: output, shape index: {}]
  %s5 = sld [smem:[#allocation0]]
  $region26: #{gqa_forward.1} parent=0
    _
  %s7 = ssub.s32 1, %s5
  %s8 = scalar_select 0, %s7, %s5
  // Predicated region
  $region2: #{gqa_forward.1} parent=0 // pred_check
    _
  $region3: #{gqa_forward.1} parent=0 // pred_check_branch
    %10 = sbr.rel (0) target = $region5
  $region4: #{gqa_forward.1} parent=0 // pred_region
    _
  $region5: #{gqa_forward.1} parent=0 // pred_fallthru
    _
  // Predicated region
  $region6: #{gqa_forward.1} parent=0 // pred_check
    _
  $region7: #{gqa_forward.1} parent=0 // pred_check_branch
    %12 = sbr.rel (0) target = $region9
  $region8: #{gqa_forward.1} parent=0 // pred_region
    _
  $region9: #{gqa_forward.1} parent=0 // pred_fallthru
    _
  // Predicated region
  $region10: #{gqa_forward.1} parent=0 // pred_check
    _
  $region11: #{gqa_forward.1} parent=0 // pred_check_branch
    %14 = sbr.rel (0) target = $region13
  $region12: #{gqa_forward.1} parent=0 // pred_region
    _
  $region13: #{gqa_forward.1} parent=0 // pred_fallthru
    _
  // Predicated region
  $region14: #{gqa_forward.1} parent=0 // pred_check
    _
  $region15: #{gqa_forward.1} parent=0 // pred_check_branch
    %16 = sbr.rel (0) target = $region17
  $region16: #{gqa_forward.1} parent=0 // pred_region
    _
  $region17: #{gqa_forward.1} parent=0 // pred_fallthru
    _
  %v17 = vld [vmem:[%s0] sm:$0xff]
  %v18 = vld [vmem:[%s0 + $0x8] sm:$0xff]
  %v19 = vld [vmem:[%s2] sm:$0xff]
  %v20 = vld [vmem:[%s2 + $0x8] sm:$0xff]
  %v21 = vld [vmem:[%s3] sm:$0xff]
  %v22 = vld [vmem:[%s3 + $0x8] sm:$0xff]
  %v23 = vld [vmem:[%s3 + $0x10] sm:$0xff]
  %v24 = vld [vmem:[%s3 + $0x18] sm:$0xff]
  %v25 = vld [vmem:[%s1] sm:$0xff]
  %v26 = vld [vmem:[%s1 + $0x8] sm:$0xff]
  %v27 = vld [vmem:[%s1 + $0x10] sm:$0xff]
  %v28 = vld [vmem:[%s1 + $0x18] sm:$0xff]
  %vm29 = vcmask 261120
  %v31 = vsel %vm29, %v17, 0
  %v34 = vsel %vm29, %v18, 0
  %36 = vmatpush.msra.mxu0 0.0
  %37 = vmatpush.msra.mxu0 0.0
  %38 = vmatpush.msra.mxu0 0.0
  %39 = vmatpush.msra.mxu0 0.0
  %40 = vmatpush.msra.mxu0 0.0
  %41 = vmatpush.msra.mxu0 0.0
  %42 = vmatpush.msra.mxu0 0.0
  %43 = vmatpush.msra.mxu0 0.0
  %44 = vmatpush.msra.mxu0 0.0
  %45 = vmatpush.msra.mxu0 0.0
  %46 = vmatpush.msra.mxu0 0.0
  %47 = vmatpush.msra.mxu0 0.0
  %48 = vmatpush.msra.mxu0 %v28
  %49 = vmatpush.msra.mxu0 %v27
  %50 = vmatpush.msra.mxu0 %v26
  %51 = vmatpush.msra.mxu0 %v25
  %52 = vmatmul.f32.gmra.mxu0 %v31
  %v53 = vpop.f32.mrf.mxu0
  %v54 = vadd.f32 0.0, %v53
  %55 = vmatmul.f32.gmra.mxu0 %v34
  %v56 = vpop.f32.mrf.mxu0
  %v57 = vadd.f32 0.0, %v56
  %58 = vdwg.mxu0
  %v59 = vmul.f32 %v54, %v19
  %v60 = vmul.f32 %v57, %v20
  %63 = vrot.lane.b32.xlu0 %v19, 16
  %v64 = vpop.permute.xlu0 %63
  %65 = vrot.lane.b32.xlu0 %v20, 16
  %v66 = vpop.permute.xlu0 %65
  %v69 = vmul.f32 %v54, %v64
  %v70 = vmul.f32 %v57, %v66
  %73 = vrot.lane.b32.xlu0 %v69, 64
  %v74 = vpop.permute.xlu0 %73
  %75 = vrot.lane.b32.xlu0 %v70, 64
  %v76 = vpop.permute.xlu0 %75
  %v79 = vadd.f32 %v59, %v74
  %v80 = vadd.f32 %v60, %v76
  %83 = vrot.lane.b32.xlu0 %v79, 96
  %v84 = vpop.permute.xlu0 %83
  %85 = vrot.lane.b32.xlu0 %v80, 96
  %v86 = vpop.permute.xlu0 %85
  %87 = vrot.lane.b32.xlu0 %v19, 32
  %v88 = vpop.permute.xlu0 %87
  %89 = vrot.lane.b32.xlu0 %v20, 32
  %v90 = vpop.permute.xlu0 %89
  %vm93 = vcmask 64512
  %v94 = vsel %vm93, %v79, 0
  %v96 = vsel %vm93, %v80, 0
  %v98 = vsel %vm93, %v84, 0
  %v100 = vsel %vm93, %v86, 0
  %102 = vmatpush.xpose.msra.mxu0 0.0
  %103 = vmatpush.xpose.msra.mxu0 0.0
  %104 = vmatpush.xpose.msra.mxu0 0.0
  %105 = vmatpush.xpose.msra.mxu0 0.0
  %106 = vmatpush.xpose.msra.mxu0 0.0
  %107 = vmatpush.xpose.msra.mxu0 0.0
  %108 = vmatpush.xpose.msra.mxu0 0.0
  %109 = vmatpush.xpose.msra.mxu0 0.0
  %110 = vmatpush.xpose.msra.mxu0 0.0
  %111 = vmatpush.xpose.msra.mxu0 0.0
  %112 = vmatpush.xpose.msra.mxu0 0.0
  %113 = vmatpush.xpose.msra.mxu0 0.0
  %114 = vmatpush.xpose.msra.mxu0 0.0
  %115 = vmatpush.xpose.msra.mxu0 0.0
  %116 = vmatpush.xpose.msra.mxu0 %v100
  %117 = vmatpush.xpose.msra.mxu0 %v98
  %118 = vmatmul.f32.gmra.mxu0 %v94
  %v119 = vpop.f32.mrf.mxu0
  %v120 = vadd.f32 %v88, %v119
  %121 = vmatmul.f32.gmra.mxu0 %v96
  %v122 = vpop.f32.mrf.mxu0
  %v123 = vadd.f32 %v90, %v122
  %124 = vdwg.mxu0
  %vm125 = vcmask 130048
  %v126 = vsel %vm125, %v120, -inf
  %127 = vmax.xlane.f32.xlu0 %v126
  %v128 = vpop.xlane.xlu0 %127
  %v129 = vsel %vm125, %v123, -inf
  %130 = vmax.xlane.f32.xlu0 %v129
  %v131 = vpop.xlane.xlu0 %130
  %v132 = vsub.f32 %v120, %v128
  %v133 = vsub.f32 %v123, %v131
  %v134 = vmul.f32 %v132, 1.442695
  %v135 = vpow.pop %v134
  %v136 = vmul.f32 %v133, 1.442695
  %v137 = vpow.pop %v136
  %v138 = vsel %vm125, %v135, 0.0
  %139 = vadd.xlane.f32.xlu0 %v138
  %v140 = vpop.xlane.xlu0 %139
  %v141 = vsel %vm125, %v137, 0.0
  %142 = vadd.xlane.f32.xlu0 %v141
  %v143 = vpop.xlane.xlu0 %142
  %v144 = vrcp.pop %v140
  %v145 = vrcp.pop %v143
  %v146 = vmul.f32 %v135, %v144
  %v147 = vmul.f32 %v137, %v145
  %150 = vrot.lane.b32.xlu0 %v54, 80
  %v151 = vpop.permute.xlu0 %150
  %152 = vrot.lane.b32.xlu0 %v57, 80
  %v153 = vpop.permute.xlu0 %152
  %v157 = vsel %vm125, %v146, 0
  %v160 = vsel %vm125, %v147, 0
  %162 = vmatpush.msra.mxu0 0.0
  %163 = vmatpush.msra.mxu0 0.0
  %164 = vmatpush.msra.mxu0 0.0
  %165 = vmatpush.msra.mxu0 0.0
  %166 = vmatpush.msra.mxu0 0.0
  %167 = vmatpush.msra.mxu0 0.0
  %168 = vmatpush.msra.mxu0 0.0
  %169 = vmatpush.msra.mxu0 0.0
  %170 = vmatpush.msra.mxu0 0.0
  %171 = vmatpush.msra.mxu0 0.0
  %172 = vmatpush.msra.mxu0 0.0
  %173 = vmatpush.msra.mxu0 0.0
  %174 = vmatpush.msra.mxu0 0.0
  %175 = vmatpush.msra.mxu0 0.0
  %176 = vmatpush.msra.mxu0 %v153
  %177 = vmatpush.msra.mxu0 %v151
  %178 = vmatmul.f32.gmra.mxu0 %v157
  %v179 = vpop.f32.mrf.mxu0
  %v180 = vadd.f32 0.0, %v179
  %181 = vmatmul.f32.gmra.mxu0 %v160
  %v182 = vpop.f32.mrf.mxu0
  %v183 = vadd.f32 0.0, %v182
  %184 = vdwg.mxu0
  %185 = vrot.lane.b32.xlu0 %v79, 120
  %v186 = vpop.permute.xlu0 %185
  %187 = vrot.lane.b32.xlu0 %v80, 120
  %v188 = vpop.permute.xlu0 %187
  %v189 = vsel %vm93, %v186, 0
  %v191 = vsel %vm93, %v188, 0
  %193 = vmatpush.xpose.msra.mxu0 0.0
  %194 = vmatpush.xpose.msra.mxu0 0.0
  %195 = vmatpush.xpose.msra.mxu0 0.0
  %196 = vmatpush.xpose.msra.mxu0 0.0
  %197 = vmatpush.xpose.msra.mxu0 0.0
  %198 = vmatpush.xpose.msra.mxu0 0.0
  %199 = vmatpush.xpose.msra.mxu0 0.0
  %200 = vmatpush.xpose.msra.mxu0 0.0
  %201 = vmatpush.xpose.msra.mxu0 0.0
  %202 = vmatpush.xpose.msra.mxu0 0.0
  %203 = vmatpush.xpose.msra.mxu0 0.0
  %204 = vmatpush.xpose.msra.mxu0 0.0
  %205 = vmatpush.xpose.msra.mxu0 0.0
  %206 = vmatpush.xpose.msra.mxu0 0.0
  %207 = vmatpush.xpose.msra.mxu0 %v100
  %208 = vmatpush.xpose.msra.mxu0 %v98
  %209 = vmatmul.f32.gmra.mxu0 %v189
  %v210 = vpop.f32.mrf.mxu0
  %v211 = vadd.f32 %v88, %v210
  %212 = vmatmul.f32.gmra.mxu0 %v191
  %v213 = vpop.f32.mrf.mxu0
  %v214 = vadd.f32 %v90, %v213
  %215 = vdwg.mxu0
  %v216 = vsel %vm125, %v211, -inf
  %217 = vmax.xlane.f32.xlu0 %v216
  %v218 = vpop.xlane.xlu0 %217
  %v219 = vsel %vm125, %v214, -inf
  %220 = vmax.xlane.f32.xlu0 %v219
  %v221 = vpop.xlane.xlu0 %220
  %v222 = vsub.f32 %v211, %v218
  %v223 = vsub.f32 %v214, %v221
  %v224 = vmul.f32 %v222, 1.442695
  %v225 = vpow.pop %v224
  %v226 = vmul.f32 %v223, 1.442695
  %v227 = vpow.pop %v226
  %v228 = vsel %vm125, %v225, 0.0
  %229 = vadd.xlane.f32.xlu0 %v228
  %v230 = vpop.xlane.xlu0 %229
  %v231 = vsel %vm125, %v227, 0.0
  %232 = vadd.xlane.f32.xlu0 %v231
  %v233 = vpop.xlane.xlu0 %232
  %v234 = vrcp.pop %v230
  %v235 = vrcp.pop %v233
  %v236 = vmul.f32 %v225, %v234
  %v237 = vmul.f32 %v227, %v235
  %v239 = vsel %vm125, %v236, 0
  %v242 = vsel %vm125, %v237, 0
  %244 = vmatpush.msra.mxu0 0.0
  %245 = vmatpush.msra.mxu0 0.0
  %246 = vmatpush.msra.mxu0 0.0
  %247 = vmatpush.msra.mxu0 0.0
  %248 = vmatpush.msra.mxu0 0.0
  %249 = vmatpush.msra.mxu0 0.0
  %250 = vmatpush.msra.mxu0 0.0
  %251 = vmatpush.msra.mxu0 0.0
  %252 = vmatpush.msra.mxu0 0.0
  %253 = vmatpush.msra.mxu0 0.0
  %254 = vmatpush.msra.mxu0 0.0
  %255 = vmatpush.msra.mxu0 0.0
  %256 = vmatpush.msra.mxu0 0.0
  %257 = vmatpush.msra.mxu0 0.0
  %258 = vmatpush.msra.mxu0 %v153
  %259 = vmatpush.msra.mxu0 %v151
  %260 = vmatmul.f32.gmra.mxu0 %v239
  %v261 = vpop.f32.mrf.mxu0
  %v262 = vadd.f32 0.0, %v261
  %263 = vmatmul.f32.gmra.mxu0 %v242
  %v264 = vpop.f32.mrf.mxu0
  %v265 = vadd.f32 0.0, %v264
  %266 = vdwg.mxu0
  %v268 = vsel %vm93, %v262, 0
  %v271 = vsel %vm93, %v265, 0
  %273 = vmatpush.msra.mxu0 0.0
  %274 = vmatpush.msra.mxu0 0.0
  %275 = vmatpush.msra.mxu0 0.0
  %276 = vmatpush.msra.mxu0 0.0
  %277 = vmatpush.msra.mxu0 0.0
  %278 = vmatpush.msra.mxu0 0.0
  %279 = vmatpush.msra.mxu0 0.0
  %280 = vmatpush.msra.mxu0 0.0
  %281 = vmatpush.msra.mxu0 0.0
  %282 = vmatpush.msra.mxu0 0.0
  %283 = vmatpush.msra.mxu0 0.0
  %284 = vmatpush.msra.mxu0 0.0
  %285 = vmatpush.msra.mxu0 0.0
  %286 = vmatpush.msra.mxu0 0.0
  %287 = vmatpush.msra.mxu0 0.0
  %288 = vmatpush.msra.mxu0 %v22
  %289 = vmatmul.f32.gmra.mxu0 %v268
  %v290 = vpop.f32.mrf.mxu0
  %v291 = vadd.f32 0.0, %v290
  %292 = vmatmul.f32.gmra.mxu0 %v271
  %v293 = vpop.f32.mrf.mxu0
  %v294 = vadd.f32 0.0, %v293
  %295 = vdwg.mxu0
  %v297 = vsel %vm93, %v180, 0
  %v300 = vsel %vm93, %v183, 0
  %302 = vmatpush.msra.mxu0 0.0
  %303 = vmatpush.msra.mxu0 0.0
  %304 = vmatpush.msra.mxu0 0.0
  %305 = vmatpush.msra.mxu0 0.0
  %306 = vmatpush.msra.mxu0 0.0
  %307 = vmatpush.msra.mxu0 0.0
  %308 = vmatpush.msra.mxu0 0.0
  %309 = vmatpush.msra.mxu0 0.0
  %310 = vmatpush.msra.mxu0 0.0
  %311 = vmatpush.msra.mxu0 0.0
  %312 = vmatpush.msra.mxu0 0.0
  %313 = vmatpush.msra.mxu0 0.0
  %314 = vmatpush.msra.mxu0 0.0
  %315 = vmatpush.msra.mxu0 0.0
  %316 = vmatpush.msra.mxu0 0.0
  %317 = vmatpush.msra.mxu0 %v21
  %318 = vmatmul.f32.gmra.mxu0 %v297
  %v319 = vpop.f32.mrf.mxu0
  %v320 = vadd.f32 %v291, %v319
  %321 = vmatmul.f32.gmra.mxu0 %v300
  %v322 = vpop.f32.mrf.mxu0
  %v323 = vadd.f32 %v294, %v322
  %324 = vdwg.mxu0
  %325 = vrot.lane.b32.xlu0 %v79, 112
  %v326 = vpop.permute.xlu0 %325
  %327 = vrot.lane.b32.xlu0 %v80, 112
  %v328 = vpop.permute.xlu0 %327
  %329 = vrot.lane.b32.xlu0 %v79, 88
  %v330 = vpop.permute.xlu0 %329
  %331 = vrot.lane.b32.xlu0 %v80, 88
  %v332 = vpop.permute.xlu0 %331
  %v333 = vsel %vm93, %v326, 0
  %v335 = vsel %vm93, %v328, 0
  %v337 = vsel %vm93, %v330, 0
  %v339 = vsel %vm93, %v332, 0
  %341 = vmatpush.xpose.msra.mxu0 0.0
  %342 = vmatpush.xpose.msra.mxu0 0.0
  %343 = vmatpush.xpose.msra.mxu0 0.0
  %344 = vmatpush.xpose.msra.mxu0 0.0
  %345 = vmatpush.xpose.msra.mxu0 0.0
  %346 = vmatpush.xpose.msra.mxu0 0.0
  %347 = vmatpush.xpose.msra.mxu0 0.0
  %348 = vmatpush.xpose.msra.mxu0 0.0
  %349 = vmatpush.xpose.msra.mxu0 0.0
  %350 = vmatpush.xpose.msra.mxu0 0.0
  %351 = vmatpush.xpose.msra.mxu0 0.0
  %352 = vmatpush.xpose.msra.mxu0 0.0
  %353 = vmatpush.xpose.msra.mxu0 0.0
  %354 = vmatpush.xpose.msra.mxu0 0.0
  %355 = vmatpush.xpose.msra.mxu0 %v339
  %356 = vmatpush.xpose.msra.mxu0 %v337
  %357 = vmatmul.f32.gmra.mxu0 %v333
  %v358 = vpop.f32.mrf.mxu0
  %v359 = vadd.f32 %v88, %v358
  %360 = vmatmul.f32.gmra.mxu0 %v335
  %v361 = vpop.f32.mrf.mxu0
  %v362 = vadd.f32 %v90, %v361
  %363 = vdwg.mxu0
  %v364 = vsel %vm125, %v359, -inf
  %365 = vmax.xlane.f32.xlu0 %v364
  %v366 = vpop.xlane.xlu0 %365
  %v367 = vsel %vm125, %v362, -inf
  %368 = vmax.xlane.f32.xlu0 %v367
  %v369 = vpop.xlane.xlu0 %368
  %v370 = vsub.f32 %v359, %v366
  %v371 = vsub.f32 %v362, %v369
  %v372 = vmul.f32 %v370, 1.442695
  %v373 = vpow.pop %v372
  %v374 = vmul.f32 %v371, 1.442695
  %v375 = vpow.pop %v374
  %v376 = vsel %vm125, %v373, 0.0
  %377 = vadd.xlane.f32.xlu0 %v376
  %v378 = vpop.xlane.xlu0 %377
  %v379 = vsel %vm125, %v375, 0.0
  %380 = vadd.xlane.f32.xlu0 %v379
  %v381 = vpop.xlane.xlu0 %380
  %v382 = vrcp.pop %v378
  %v383 = vrcp.pop %v381
  %v384 = vmul.f32 %v373, %v382
  %v385 = vmul.f32 %v375, %v383
  %386 = vrot.lane.b32.xlu0 %v54, 72
  %v387 = vpop.permute.xlu0 %386
  %388 = vrot.lane.b32.xlu0 %v57, 72
  %v389 = vpop.permute.xlu0 %388
  %v393 = vsel %vm125, %v384, 0
  %v396 = vsel %vm125, %v385, 0
  %398 = vmatpush.msra.mxu0 0.0
  %399 = vmatpush.msra.mxu0 0.0
  %400 = vmatpush.msra.mxu0 0.0
  %401 = vmatpush.msra.mxu0 0.0
  %402 = vmatpush.msra.mxu0 0.0
  %403 = vmatpush.msra.mxu0 0.0
  %404 = vmatpush.msra.mxu0 0.0
  %405 = vmatpush.msra.mxu0 0.0
  %406 = vmatpush.msra.mxu0 0.0
  %407 = vmatpush.msra.mxu0 0.0
  %408 = vmatpush.msra.mxu0 0.0
  %409 = vmatpush.msra.mxu0 0.0
  %410 = vmatpush.msra.mxu0 0.0
  %411 = vmatpush.msra.mxu0 0.0
  %412 = vmatpush.msra.mxu0 %v389
  %413 = vmatpush.msra.mxu0 %v387
  %414 = vmatmul.f32.gmra.mxu0 %v393
  %v415 = vpop.f32.mrf.mxu0
  %v416 = vadd.f32 0.0, %v415
  %417 = vmatmul.f32.gmra.mxu0 %v396
  %v418 = vpop.f32.mrf.mxu0
  %v419 = vadd.f32 0.0, %v418
  %420 = vdwg.mxu0
  %v422 = vsel %vm93, %v416, 0
  %v425 = vsel %vm93, %v419, 0
  %427 = vmatpush.msra.mxu0 0.0
  %428 = vmatpush.msra.mxu0 0.0
  %429 = vmatpush.msra.mxu0 0.0
  %430 = vmatpush.msra.mxu0 0.0
  %431 = vmatpush.msra.mxu0 0.0
  %432 = vmatpush.msra.mxu0 0.0
  %433 = vmatpush.msra.mxu0 0.0
  %434 = vmatpush.msra.mxu0 0.0
  %435 = vmatpush.msra.mxu0 0.0
  %436 = vmatpush.msra.mxu0 0.0
  %437 = vmatpush.msra.mxu0 0.0
  %438 = vmatpush.msra.mxu0 0.0
  %439 = vmatpush.msra.mxu0 0.0
  %440 = vmatpush.msra.mxu0 0.0
  %441 = vmatpush.msra.mxu0 0.0
  %442 = vmatpush.msra.mxu0 %v23
  %443 = vmatmul.f32.gmra.mxu0 %v422
  %v444 = vpop.f32.mrf.mxu0
  %v445 = vadd.f32 0.0, %v444
  %446 = vmatmul.f32.gmra.mxu0 %v425
  %v447 = vpop.f32.mrf.mxu0
  %v448 = vadd.f32 0.0, %v447
  %449 = vdwg.mxu0
  %v450 = vadd.f32 %v320, %v445
  %v451 = vadd.f32 %v323, %v448
  %452 = vrot.lane.b32.xlu0 %v79, 104
  %v453 = vpop.permute.xlu0 %452
  %454 = vrot.lane.b32.xlu0 %v80, 104
  %v455 = vpop.permute.xlu0 %454
  %v456 = vsel %vm93, %v453, 0
  %v458 = vsel %vm93, %v455, 0
  %460 = vmatpush.xpose.msra.mxu0 0.0
  %461 = vmatpush.xpose.msra.mxu0 0.0
  %462 = vmatpush.xpose.msra.mxu0 0.0
  %463 = vmatpush.xpose.msra.mxu0 0.0
  %464 = vmatpush.xpose.msra.mxu0 0.0
  %465 = vmatpush.xpose.msra.mxu0 0.0
  %466 = vmatpush.xpose.msra.mxu0 0.0
  %467 = vmatpush.xpose.msra.mxu0 0.0
  %468 = vmatpush.xpose.msra.mxu0 0.0
  %469 = vmatpush.xpose.msra.mxu0 0.0
  %470 = vmatpush.xpose.msra.mxu0 0.0
  %471 = vmatpush.xpose.msra.mxu0 0.0
  %472 = vmatpush.xpose.msra.mxu0 0.0
  %473 = vmatpush.xpose.msra.mxu0 0.0
  %474 = vmatpush.xpose.msra.mxu0 %v339
  %475 = vmatpush.xpose.msra.mxu0 %v337
  %476 = vmatmul.f32.gmra.mxu0 %v456
  %v477 = vpop.f32.mrf.mxu0
  %v478 = vadd.f32 %v88, %v477
  %479 = vmatmul.f32.gmra.mxu0 %v458
  %v480 = vpop.f32.mrf.mxu0
  %v481 = vadd.f32 %v90, %v480
  %482 = vdwg.mxu0
  %v483 = vsel %vm125, %v478, -inf
  %484 = vmax.xlane.f32.xlu0 %v483
  %v485 = vpop.xlane.xlu0 %484
  %v486 = vsel %vm125, %v481, -inf
  %487 = vmax.xlane.f32.xlu0 %v486
  %v488 = vpop.xlane.xlu0 %487
  %v489 = vsub.f32 %v478, %v485
  %v490 = vsub.f32 %v481, %v488
  %v491 = vmul.f32 %v489, 1.442695
  %v492 = vpow.pop %v491
  %v493 = vmul.f32 %v490, 1.442695
  %v494 = vpow.pop %v493
  %v495 = vsel %vm125, %v492, 0.0
  %496 = vadd.xlane.f32.xlu0 %v495
  %v497 = vpop.xlane.xlu0 %496
  %v498 = vsel %vm125, %v494, 0.0
  %499 = vadd.xlane.f32.xlu0 %v498
  %v500 = vpop.xlane.xlu0 %499
  %v501 = vrcp.pop %v497
  %v502 = vrcp.pop %v500
  %v503 = vmul.f32 %v492, %v501
  %v504 = vmul.f32 %v494, %v502
  %v506 = vsel %vm125, %v503, 0
  %v509 = vsel %vm125, %v504, 0
  %511 = vmatpush.msra.mxu0 0.0
  %512 = vmatpush.msra.mxu0 0.0
  %513 = vmatpush.msra.mxu0 0.0
  %514 = vmatpush.msra.mxu0 0.0
  %515 = vmatpush.msra.mxu0 0.0
  %516 = vmatpush.msra.mxu0 0.0
  %517 = vmatpush.msra.mxu0 0.0
  %518 = vmatpush.msra.mxu0 0.0
  %519 = vmatpush.msra.mxu0 0.0
  %520 = vmatpush.msra.mxu0 0.0
  %521 = vmatpush.msra.mxu0 0.0
  %522 = vmatpush.msra.mxu0 0.0
  %523 = vmatpush.msra.mxu0 0.0
  %524 = vmatpush.msra.mxu0 0.0
  %525 = vmatpush.msra.mxu0 %v389
  %526 = vmatpush.msra.mxu0 %v387
  %527 = vmatmul.f32.gmra.mxu0 %v506
  %v528 = vpop.f32.mrf.mxu0
  %v529 = vadd.f32 0.0, %v528
  %530 = vmatmul.f32.gmra.mxu0 %v509
  %v531 = vpop.f32.mrf.mxu0
  %v532 = vadd.f32 0.0, %v531
  %533 = vdwg.mxu0
  %v535 = vsel %vm93, %v529, 0
  %v538 = vsel %vm93, %v532, 0
  %540 = vmatpush.msra.mxu0 0.0
  %541 = vmatpush.msra.mxu0 0.0
  %542 = vmatpush.msra.mxu0 0.0
  %543 = vmatpush.msra.mxu0 0.0
  %544 = vmatpush.msra.mxu0 0.0
  %545 = vmatpush.msra.mxu0 0.0
  %546 = vmatpush.msra.mxu0 0.0
  %547 = vmatpush.msra.mxu0 0.0
  %548 = vmatpush.msra.mxu0 0.0
  %549 = vmatpush.msra.mxu0 0.0
  %550 = vmatpush.msra.mxu0 0.0
  %551 = vmatpush.msra.mxu0 0.0
  %552 = vmatpush.msra.mxu0 0.0
  %553 = vmatpush.msra.mxu0 0.0
  %554 = vmatpush.msra.mxu0 0.0
  %555 = vmatpush.msra.mxu0 %v24
  %556 = vmatmul.f32.gmra.mxu0 %v535
  %v557 = vpop.f32.mrf.mxu0
  %v558 = vadd.f32 0.0, %v557
  %559 = vmatmul.f32.gmra.mxu0 %v538
  %v560 = vpop.f32.mrf.mxu0
  %v561 = vadd.f32 0.0, %v560
  %562 = vdwg.mxu0
  %v563 = vadd.f32 %v450, %v558
  %v564 = vadd.f32 %v451, %v561
  %565 = vst [vmem:[%s4] sm:$0xff] %v563
  %566 = vst [vmem:[%s4 + $0x8] sm:$0xff] %v564
  // Predicated region
  $region18: #{gqa_forward.1} parent=0 // pred_check
    _
  $region19: #{gqa_forward.1} parent=0 // pred_check_branch
    %568 = sbr.rel (0) target = $region21
  $region20: #{gqa_forward.1} parent=0 // pred_region
    _
  $region21: #{gqa_forward.1} parent=0 // pred_fallthru
    _
  // Predicated region
  $region22: #{gqa_forward.1} parent=0 // pred_check
    _
  $region23: #{gqa_forward.1} parent=0 // pred_check_branch
    %570 = sbr.rel (0) target = $region25
  $region24: #{gqa_forward.1} parent=0 // pred_region
    _
  $region25: #{gqa_forward.1} parent=0 // pred_fallthru
    _

</llo_original>
